<compile_context>
chip_gen: v5e
topology: v5e:2x2
jax: 0.10.0
libtpu: 0.0.40
codegen_flags: <defaults>
</compile_context>

<pallas_src>
import jax
import jax.numpy as jnp
from jax import lax
from jax.experimental import pallas as pl
from jax.experimental.pallas import tpu as pltpu

BN_EPS = 1e-5


# ------------------------------ fused Pallas kernel ------------------------------ #
def _make_fused_kernel(cin, Wo, M):
    P = Wo + 1  # flat zero-pad each side: covers row shifts +/-Wo and col shifts +/-1

    def conv3x3_s1(x_f32, w, ml, mr):
        """3x3 / stride-1 / pad-1 conv on a flattened (C, Ho*Wo) image, all in VMEM.

        Taps are shifted static slices of a flat zero-padded buffer; the +/-1
        horizontal taps are column-masked to kill row wrap-around. All 9 taps
        are folded into a single K=9*C matmul (tap-major rows, matching the
        folded weight column order).
        """
        C = x_f32.shape[0]
        zp = jnp.zeros((C, P), jnp.bfloat16)
        xb = jnp.concatenate([zp, x_f32.astype(jnp.bfloat16), zp], axis=1)  # (C, M+2P)
        taps = []
        for kh in range(3):
            for kw in range(3):
                s = P + (kh - 1) * Wo + (kw - 1)
                t = xb[:, s:s + M]
                if kw == 0:
                    t = t * ml          # left tap: invalid at wo == 0
                elif kw == 2:
                    t = t * mr          # right tap: invalid at wo == Wo-1
                taps.append(t)
        xcol = jnp.concatenate(taps, axis=0)                    # (9*C, M) bf16
        return jnp.dot(w, xcol, preferred_element_type=jnp.float32)

    def kernel(xcol_ref, cm_ref, w1_ref, b1_ref, wd_ref, bd_ref,
               w12_ref, b12_ref, w21_ref, b21_ref, w22_ref, b22_ref, o_ref):
        cm = cm_ref[...]                                        # (2, M) bf16 0/1 masks
        ml = cm[0:1, :]
        mr = cm[1:2, :]
        xcol = xcol_ref[0]                                      # (9*Cin, M) bf16 stride-2 taps

        # ---- block1: conv1(3x3,s2)+BN+ReLU and 1x1/s2 downsample+BN (center-tap rows) ---- #
        h1 = jnp.maximum(
            jnp.dot(w1_ref[...], xcol, preferred_element_type=jnp.float32) + b1_ref[...], 0.0)
        idn = jnp.dot(wd_ref[...], xcol[4 * cin:5 * cin, :],
                      preferred_element_type=jnp.float32) + bd_ref[...]

        # ---- block1: conv2(3x3,s1)+BN + residual add + ReLU (f32, never leaves VMEM) ---- #
        o1 = jnp.maximum(conv3x3_s1(h1, w12_ref[...], ml, mr) + b12_ref[...] + idn, 0.0)

        # ---- block2: conv1(3x3,s1)+BN+ReLU ---- #
        h2 = jnp.maximum(conv3x3_s1(o1, w21_ref[...], ml, mr) + b21_ref[...], 0.0)

        # ---- block2: conv2(3x3,s1)+BN + identity residual + ReLU ---- #
        o2 = jnp.maximum(conv3x3_s1(h2, w22_ref[...], ml, mr) + b22_ref[...] + o1, 0.0)

        o_ref[0] = o2.astype(o_ref.dtype)

    return kernel


# --------------------------------- JAX wrapper ---------------------------------- #
def _im2col_stride2(x_nchw):
    """(B, Cin, H, W) -> (B, 9*Cin, Ho*Wo) bf16, tap-major (kh, kw, cin) rows."""
    B, C, H, W = x_nchw.shape
    Ho, Wo = H // 2, W // 2
    xp = jnp.pad(x_nchw, ((0, 0), (0, 0), (1, 1), (1, 1)))
    taps = []
    for kh in range(3):
        for kw in range(3):
            sl = lax.slice(xp, (0, 0, kh, kw),
                           (B, C, kh + 2 * (Ho - 1) + 1, kw + 2 * (Wo - 1) + 1),
                           (1, 1, 2, 2))
            taps.append(sl.reshape(B, C, Ho * Wo))
    return jnp.concatenate(taps, axis=1).astype(jnp.bfloat16)


def _fold_bn(gamma, beta, mean, var):
    scale = gamma / jnp.sqrt(var + BN_EPS)
    return scale, beta - mean * scale


def _fold_w(w_hwio, bn):
    """Fold BN scale into the conv weight -> (Cout, K) bf16 weight, (Cout, 1) f32 bias."""
    kh, kw, cin, cout = w_hwio.shape
    scale, bias = _fold_bn(*bn)
    w = (w_hwio.reshape(kh * kw * cin, cout) * scale).T
    return w.astype(jnp.bfloat16), bias.reshape(cout, 1)


def prepare_params(params):
    """One-time prep: fold BN into weights, transpose to (Cout, K), cast to bf16."""
    p1, p2 = params["block1"], params["block2"]
    w1, b1 = _fold_w(p1["w1"], p1["bn1"])      # (Cout, 9*Cin)
    wd, bd = _fold_w(p1["w_d"], p1["bn_d"])    # (Cout, Cin) — separate small matmul, no zero-pad
    w12, b12 = _fold_w(p1["w2"], p1["bn2"])    # (Cout, 9*Cout)
    w21, b21 = _fold_w(p2["w1"], p2["bn1"])
    w22, b22 = _fold_w(p2["w2"], p2["bn2"])
    return {"w1": w1, "b1": b1, "wd": wd, "bd": bd, "w12": w12, "b12": b12,
            "w21": w21, "b21": b21, "w22": w22, "b22": b22}


def down_res_block_forward(x_nchw, prep):
    B, Cin, H, W = x_nchw.shape
    Cout = prep["w1"].shape[0]
    Ho, Wo = H // 2, W // 2
    M = Ho * Wo

    xcol = _im2col_stride2(x_nchw)                                # (B, 9*Cin, M) bf16
    col = jnp.arange(M, dtype=jnp.int32) % Wo
    col_mask = jnp.stack([col >= 1, col <= Wo - 2]).astype(jnp.bfloat16)   # (2, M)

    kernel = _make_fused_kernel(Cin, Wo, M)

    def full(shape):
        return pl.BlockSpec(shape, lambda b: (0,) * len(shape))

    w_elems = Cout * 9 * Cin + Cout * Cin + 3 * Cout * 9 * Cout
    flops = 2 * B * M * w_elems
    bytes_accessed = B * M * (9 * Cin * 2 + Cout * 4) + 2 * M * 2 + w_elems * 2 + 5 * Cout * 4

    out = pl.pallas_call(
        kernel,
        out_shape=jax.ShapeDtypeStruct((B, Cout, M), jnp.float32),
        grid=(B,),
        in_specs=[
            pl.BlockSpec((1, 9 * Cin, M), lambda b: (b, 0, 0)),   # per-image stride-2 taps
            full((2, M)),                                          # column masks (resident)
            full((Cout, 9 * Cin)), full((Cout, 1)),                # block1 conv1
            full((Cout, Cin)), full((Cout, 1)),                    # block1 1x1 downsample
            full((Cout, 9 * Cout)), full((Cout, 1)),               # block1 conv2
            full((Cout, 9 * Cout)), full((Cout, 1)),               # block2 conv1
            full((Cout, 9 * Cout)), full((Cout, 1)),               # block2 conv2
        ],
        out_specs=pl.BlockSpec((1, Cout, M), lambda b: (b, 0, 0)),
        compiler_params=pltpu.CompilerParams(
            dimension_semantics=("parallel",),       # B>=2 -> both v7x TensorCores busy
            vmem_limit_bytes=32 * 1024 * 1024),      # explicit scoped-VMEM limit (v5e default 16 MiB)
        cost_estimate=pl.CostEstimate(flops=flops, transcendentals=0,
                                      bytes_accessed=bytes_accessed),
    )(xcol, col_mask, prep["w1"], prep["b1"], prep["wd"], prep["bd"],
      prep["w12"], prep["b12"], prep["w21"], prep["b21"], prep["w22"], prep["b22"])

    return out.reshape(B, Cout, Ho, Wo)               # NCHW


# ---------------------------- plain-JAX reference ---------------------------- #
def _conv_ref(x, w, stride, pad):
    return lax.conv_general_dilated(
        x, w, window_strides=(stride, stride), padding=pad,
        dimension_numbers=("NHWC", "HWIO", "NHWC"))


def _bn_ref(x, gamma, beta, mean, var):
    return (x - mean) / jnp.sqrt(var + BN_EPS) * gamma + beta


def basic_block_ref(x, p, stride, has_downsample):
    h = _conv_ref(x, p["w1"], stride, [(1, 1), (1, 1)])
    h = jax.nn.relu(_bn_ref(h, *p["bn1"]))
    h = _conv_ref(h, p["w2"], 1, [(1, 1), (1, 1)])
    h = _bn_ref(h, *p["bn2"])
    if has_downsample:
        idn = _bn_ref(_conv_ref(x, p["w_d"], stride, [(0, 0), (0, 0)]), *p["bn_d"])
    else:
        idn = x
    return jax.nn.relu(h + idn)


# -------------------------------- params init -------------------------------- #
def init_params(key, cin, cout):
    def bn_params(k, c):
        k1, k2, k3, k4 = jax.random.split(k, 4)
        gamma = 1.0 + 0.1 * jax.random.normal(k1, (c,), jnp.float32)
        beta = 0.1 * jax.random.normal(k2, (c,), jnp.float32)
        mean = 0.1 * jax.random.normal(k3, (c,), jnp.float32)
        var = jax.random.uniform(k4, (c,), jnp.float32, 0.5, 1.5)
        return (gamma, beta, mean, var)

    keys = jax.random.split(key, 10)
    block1 = {
        "w1": 0.1 * jax.random.normal(keys[0], (3, 3, cin, cout), jnp.float32),
        "bn1": bn_params(keys[1], cout),
        "w2": 0.1 * jax.random.normal(keys[2], (3, 3, cout, cout), jnp.float32),
        "bn2": bn_params(keys[3], cout),
        "w_d": 0.1 * jax.random.normal(keys[4], (1, 1, cin, cout), jnp.float32),
        "bn_d": bn_params(keys[5], cout),
    }
    block2 = {
        "w1": 0.1 * jax.random.normal(keys[6], (3, 3, cout, cout), jnp.float32),
        "bn1": bn_params(keys[7], cout),
        "w2": 0.1 * jax.random.normal(keys[8], (3, 3, cout, cout), jnp.float32),
        "bn2": bn_params(keys[9], cout),
    }
    return {"block1": block1, "block2": block2}


# ----------------------------------- main ------------------------------------ #
if __name__ == "__main__":
    key = jax.random.PRNGKey(0)
    kx, kp = jax.random.split(key)

    B, Cin, H, W = 2, 4, 16, 16
    Cout = 8
    x = jax.random.normal(kx, (B, Cin, H, W), jnp.float32)   # PyTorch NCHW input
    params = init_params(kp, Cin, Cout)

    prep = prepare_params(params)                             # one-time BN/weight fold
    out = jax.jit(down_res_block_forward)(x, prep)
    out = jax.block_until_ready(out)

    # reference check (BatchNorm in inference mode with running stats)
    x_nhwc = jnp.transpose(x, (0, 2, 3, 1))
    ref = basic_block_ref(x_nhwc, params["block1"], 2, True)
    ref = basic_block_ref(ref, params["block2"], 1, False)
    ref = jnp.transpose(ref, (0, 3, 1, 2))

    assert out.shape == (B, Cout, H // 2, W // 2), out.shape
    # bf16 matmul inputs (f32 accumulation/epilogue) -> looser tolerance than pure f32
    assert jnp.allclose(out, ref, atol=5e-2, rtol=5e-2), \
        float(jnp.max(jnp.abs(out - ref)))
    print("KERNEL_OK")
</pallas_src>

<mosaic_0001>
module attributes {stable_mosaic.version = 11 : i64} {
  func.func @kernel(%arg0: i32, %arg1: memref<1x36x64xbf16, #tpu.memory_space<vmem>>, %arg2: memref<2x64xbf16, #tpu.memory_space<vmem>>, %arg3: memref<8x36xbf16, #tpu.memory_space<vmem>>, %arg4: memref<8x1xf32, #tpu.memory_space<vmem>>, %arg5: memref<8x4xbf16, #tpu.memory_space<vmem>>, %arg6: memref<8x1xf32, #tpu.memory_space<vmem>>, %arg7: memref<8x72xbf16, #tpu.memory_space<vmem>>, %arg8: memref<8x1xf32, #tpu.memory_space<vmem>>, %arg9: memref<8x72xbf16, #tpu.memory_space<vmem>>, %arg10: memref<8x1xf32, #tpu.memory_space<vmem>>, %arg11: memref<8x72xbf16, #tpu.memory_space<vmem>>, %arg12: memref<8x1xf32, #tpu.memory_space<vmem>>, %arg13: memref<1x8x64xf32, #tpu.memory_space<vmem>>) attributes {dimension_semantics = [#tpu.dimension_semantics<parallel>], iteration_bounds = array<i64: 2>, scalar_prefetch = 0 : i64, scratch_operands = 0 : i64, tpu.core_type = #tpu.core_type<tc>, window_params = [{transform_indices = @transform_0, window_bounds = array<i64: 1, 36, 64>}, {pipeline_mode = #tpu.pipeline_mode<synchronous>, transform_indices = @transform_1, window_bounds = array<i64: 2, 64>}, {pipeline_mode = #tpu.pipeline_mode<synchronous>, transform_indices = @transform_2, window_bounds = array<i64: 8, 36>}, {pipeline_mode = #tpu.pipeline_mode<synchronous>, transform_indices = @transform_3, window_bounds = array<i64: 8, 1>}, {pipeline_mode = #tpu.pipeline_mode<synchronous>, transform_indices = @transform_4, window_bounds = array<i64: 8, 4>}, {pipeline_mode = #tpu.pipeline_mode<synchronous>, transform_indices = @transform_5, window_bounds = array<i64: 8, 1>}, {pipeline_mode = #tpu.pipeline_mode<synchronous>, transform_indices = @transform_6, window_bounds = array<i64: 8, 72>}, {pipeline_mode = #tpu.pipeline_mode<synchronous>, transform_indices = @transform_7, window_bounds = array<i64: 8, 1>}, {pipeline_mode = #tpu.pipeline_mode<synchronous>, transform_indices = @transform_8, window_bounds = array<i64: 8, 72>}, {pipeline_mode = #tpu.pipeline_mode<synchronous>, transform_indices = @transform_9, window_bounds = array<i64: 8, 1>}, {pipeline_mode = #tpu.pipeline_mode<synchronous>, transform_indices = @transform_10, window_bounds = array<i64: 8, 72>}, {pipeline_mode = #tpu.pipeline_mode<synchronous>, transform_indices = @transform_11, window_bounds = array<i64: 8, 1>}, {transform_indices = @transform_12, window_bounds = array<i64: 1, 8, 64>}]} {
    %c0 = arith.constant 0 : index
    %c0_0 = arith.constant 0 : index
    %0 = vector.load %arg2[%c0, %c0_0] : memref<2x64xbf16, #tpu.memory_space<vmem>>, vector<2x64xbf16>
    %1 = vector.extract_strided_slice %0 {offsets = [0, 0], sizes = [1, 64], strides = [1, 1]} : vector<2x64xbf16> to vector<1x64xbf16>
    %2 = vector.extract_strided_slice %0 {offsets = [1, 0], sizes = [1, 64], strides = [1, 1]} : vector<2x64xbf16> to vector<1x64xbf16>
    %c0_1 = arith.constant 0 : index
    %c0_2 = arith.constant 0 : index
    %c0_3 = arith.constant 0 : index
    %3 = vector.load %arg1[%c0_1, %c0_2, %c0_3] : memref<1x36x64xbf16, #tpu.memory_space<vmem>>, vector<1x36x64xbf16>
    %4 = vector.shape_cast %3 : vector<1x36x64xbf16> to vector<36x64xbf16>
    %c0_4 = arith.constant 0 : index
    %c0_5 = arith.constant 0 : index
    %5 = vector.load %arg3[%c0_4, %c0_5] : memref<8x36xbf16, #tpu.memory_space<vmem>>, vector<8x36xbf16>
    %cst = arith.constant dense<0.000000e+00> : vector<8x64xf32>
    %6 = tpu.matmul %5, %4, %cst {dimension_numbers = #tpu.dot_dimension_numbers<[1], [0], [0], [1], [0, 0, 1, 1], [], []>} : vector<8x36xbf16>, vector<36x64xbf16>, vector<8x64xf32> -> vector<8x64xf32>
    %c0_6 = arith.constant 0 : index
    %c0_7 = arith.constant 0 : index
    %7 = vector.load %arg4[%c0_6, %c0_7] : memref<8x1xf32, #tpu.memory_space<vmem>>, vector<8x1xf32>
    %8 = vector.broadcast %7 : vector<8x1xf32> to vector<8x64xf32>
    %9 = arith.addf %6, %8 : vector<8x64xf32>
    %cst_8 = arith.constant 0.000000e+00 : f32
    %10 = vector.broadcast %cst_8 : f32 to vector<8x64xf32>
    %11 = arith.maximumf %9, %10 : vector<8x64xf32>
    %c0_9 = arith.constant 0 : index
    %c0_10 = arith.constant 0 : index
    %12 = vector.load %arg5[%c0_9, %c0_10] : memref<8x4xbf16, #tpu.memory_space<vmem>>, vector<8x4xbf16>
    %13 = vector.extract_strided_slice %4 {offsets = [16, 0], sizes = [4, 64], strides = [1, 1]} : vector<36x64xbf16> to vector<4x64xbf16>
    %cst_11 = arith.constant dense<0.000000e+00> : vector<8x64xf32>
    %14 = tpu.matmul %12, %13, %cst_11 {dimension_numbers = #tpu.dot_dimension_numbers<[1], [0], [0], [1], [0, 0, 1, 1], [], []>} : vector<8x4xbf16>, vector<4x64xbf16>, vector<8x64xf32> -> vector<8x64xf32>
    %c0_12 = arith.constant 0 : index
    %c0_13 = arith.constant 0 : index
    %15 = vector.load %arg6[%c0_12, %c0_13] : memref<8x1xf32, #tpu.memory_space<vmem>>, vector<8x1xf32>
    %16 = vector.broadcast %15 : vector<8x1xf32> to vector<8x64xf32>
    %17 = arith.addf %14, %16 : vector<8x64xf32>
    %c0_14 = arith.constant 0 : index
    %c0_15 = arith.constant 0 : index
    %18 = vector.load %arg7[%c0_14, %c0_15] : memref<8x72xbf16, #tpu.memory_space<vmem>>, vector<8x72xbf16>
    %cst_16 = arith.constant 0.000000e+00 : bf16
    %19 = vector.broadcast %cst_16 : bf16 to vector<8x9xbf16>
    %20 = arith.truncf %11 : vector<8x64xf32> to vector<8x64xbf16>
    %21 = tpu.concatenate %19, %20, %19 in 1 : vector<8x9xbf16>, vector<8x64xbf16>, vector<8x9xbf16> -> vector<8x82xbf16>
    %22 = vector.extract_strided_slice %21 {offsets = [0, 0], sizes = [8, 64], strides = [1, 1]} : vector<8x82xbf16> to vector<8x64xbf16>
    %23 = vector.broadcast %1 : vector<1x64xbf16> to vector<8x64xbf16>
    %24 = arith.mulf %22, %23 : vector<8x64xbf16>
    %25 = vector.extract_strided_slice %21 {offsets = [0, 1], sizes = [8, 64], strides = [1, 1]} : vector<8x82xbf16> to vector<8x64xbf16>
    %26 = vector.extract_strided_slice %21 {offsets = [0, 2], sizes = [8, 64], strides = [1, 1]} : vector<8x82xbf16> to vector<8x64xbf16>
    %27 = vector.broadcast %2 : vector<1x64xbf16> to vector<8x64xbf16>
    %28 = arith.mulf %26, %27 : vector<8x64xbf16>
    %29 = vector.extract_strided_slice %21 {offsets = [0, 8], sizes = [8, 64], strides = [1, 1]} : vector<8x82xbf16> to vector<8x64xbf16>
    %30 = vector.broadcast %1 : vector<1x64xbf16> to vector<8x64xbf16>
    %31 = arith.mulf %29, %30 : vector<8x64xbf16>
    %32 = vector.extract_strided_slice %21 {offsets = [0, 9], sizes = [8, 64], strides = [1, 1]} : vector<8x82xbf16> to vector<8x64xbf16>
    %33 = vector.extract_strided_slice %21 {offsets = [0, 10], sizes = [8, 64], strides = [1, 1]} : vector<8x82xbf16> to vector<8x64xbf16>
    %34 = vector.broadcast %2 : vector<1x64xbf16> to vector<8x64xbf16>
    %35 = arith.mulf %33, %34 : vector<8x64xbf16>
    %36 = vector.extract_strided_slice %21 {offsets = [0, 16], sizes = [8, 64], strides = [1, 1]} : vector<8x82xbf16> to vector<8x64xbf16>
    %37 = vector.broadcast %1 : vector<1x64xbf16> to vector<8x64xbf16>
    %38 = arith.mulf %36, %37 : vector<8x64xbf16>
    %39 = vector.extract_strided_slice %21 {offsets = [0, 17], sizes = [8, 64], strides = [1, 1]} : vector<8x82xbf16> to vector<8x64xbf16>
    %40 = vector.extract_strided_slice %21 {offsets = [0, 18], sizes = [8, 64], strides = [1, 1]} : vector<8x82xbf16> to vector<8x64xbf16>
    %41 = vector.broadcast %2 : vector<1x64xbf16> to vector<8x64xbf16>
    %42 = arith.mulf %40, %41 : vector<8x64xbf16>
    %43 = tpu.concatenate %24, %25, %28, %31, %32, %35, %38, %39, %42 in 0 : vector<8x64xbf16>, vector<8x64xbf16>, vector<8x64xbf16>, vector<8x64xbf16>, vector<8x64xbf16>, vector<8x64xbf16>, vector<8x64xbf16>, vector<8x64xbf16>, vector<8x64xbf16> -> vector<72x64xbf16>
    %cst_17 = arith.constant dense<0.000000e+00> : vector<8x64xf32>
    %44 = tpu.matmul %18, %43, %cst_17 {dimension_numbers = #tpu.dot_dimension_numbers<[1], [0], [0], [1], [0, 0, 1, 1], [], []>} : vector<8x72xbf16>, vector<72x64xbf16>, vector<8x64xf32> -> vector<8x64xf32>
    %c0_18 = arith.constant 0 : index
    %c0_19 = arith.constant 0 : index
    %45 = vector.load %arg8[%c0_18, %c0_19] : memref<8x1xf32, #tpu.memory_space<vmem>>, vector<8x1xf32>
    %46 = vector.broadcast %45 : vector<8x1xf32> to vector<8x64xf32>
    %47 = arith.addf %44, %46 : vector<8x64xf32>
    %48 = arith.addf %47, %17 : vector<8x64xf32>
    %cst_20 = arith.constant 0.000000e+00 : f32
    %49 = vector.broadcast %cst_20 : f32 to vector<8x64xf32>
    %50 = arith.maximumf %48, %49 : vector<8x64xf32>
    %c0_21 = arith.constant 0 : index
    %c0_22 = arith.constant 0 : index
    %51 = vector.load %arg9[%c0_21, %c0_22] : memref<8x72xbf16, #tpu.memory_space<vmem>>, vector<8x72xbf16>
    %cst_23 = arith.constant 0.000000e+00 : bf16
    %52 = vector.broadcast %cst_23 : bf16 to vector<8x9xbf16>
    %53 = arith.truncf %50 : vector<8x64xf32> to vector<8x64xbf16>
    %54 = tpu.concatenate %52, %53, %52 in 1 : vector<8x9xbf16>, vector<8x64xbf16>, vector<8x9xbf16> -> vector<8x82xbf16>
    %55 = vector.extract_strided_slice %54 {offsets = [0, 0], sizes = [8, 64], strides = [1, 1]} : vector<8x82xbf16> to vector<8x64xbf16>
    %56 = vector.broadcast %1 : vector<1x64xbf16> to vector<8x64xbf16>
    %57 = arith.mulf %55, %56 : vector<8x64xbf16>
    %58 = vector.extract_strided_slice %54 {offsets = [0, 1], sizes = [8, 64], strides = [1, 1]} : vector<8x82xbf16> to vector<8x64xbf16>
    %59 = vector.extract_strided_slice %54 {offsets = [0, 2], sizes = [8, 64], strides = [1, 1]} : vector<8x82xbf16> to vector<8x64xbf16>
    %60 = vector.broadcast %2 : vector<1x64xbf16> to vector<8x64xbf16>
    %61 = arith.mulf %59, %60 : vector<8x64xbf16>
    %62 = vector.extract_strided_slice %54 {offsets = [0, 8], sizes = [8, 64], strides = [1, 1]} : vector<8x82xbf16> to vector<8x64xbf16>
    %63 = vector.broadcast %1 : vector<1x64xbf16> to vector<8x64xbf16>
    %64 = arith.mulf %62, %63 : vector<8x64xbf16>
    %65 = vector.extract_strided_slice %54 {offsets = [0, 9], sizes = [8, 64], strides = [1, 1]} : vector<8x82xbf16> to vector<8x64xbf16>
    %66 = vector.extract_strided_slice %54 {offsets = [0, 10], sizes = [8, 64], strides = [1, 1]} : vector<8x82xbf16> to vector<8x64xbf16>
    %67 = vector.broadcast %2 : vector<1x64xbf16> to vector<8x64xbf16>
    %68 = arith.mulf %66, %67 : vector<8x64xbf16>
    %69 = vector.extract_strided_slice %54 {offsets = [0, 16], sizes = [8, 64], strides = [1, 1]} : vector<8x82xbf16> to vector<8x64xbf16>
    %70 = vector.broadcast %1 : vector<1x64xbf16> to vector<8x64xbf16>
    %71 = arith.mulf %69, %70 : vector<8x64xbf16>
    %72 = vector.extract_strided_slice %54 {offsets = [0, 17], sizes = [8, 64], strides = [1, 1]} : vector<8x82xbf16> to vector<8x64xbf16>
    %73 = vector.extract_strided_slice %54 {offsets = [0, 18], sizes = [8, 64], strides = [1, 1]} : vector<8x82xbf16> to vector<8x64xbf16>
    %74 = vector.broadcast %2 : vector<1x64xbf16> to vector<8x64xbf16>
    %75 = arith.mulf %73, %74 : vector<8x64xbf16>
    %76 = tpu.concatenate %57, %58, %61, %64, %65, %68, %71, %72, %75 in 0 : vector<8x64xbf16>, vector<8x64xbf16>, vector<8x64xbf16>, vector<8x64xbf16>, vector<8x64xbf16>, vector<8x64xbf16>, vector<8x64xbf16>, vector<8x64xbf16>, vector<8x64xbf16> -> vector<72x64xbf16>
    %cst_24 = arith.constant dense<0.000000e+00> : vector<8x64xf32>
    %77 = tpu.matmul %51, %76, %cst_24 {dimension_numbers = #tpu.dot_dimension_numbers<[1], [0], [0], [1], [0, 0, 1, 1], [], []>} : vector<8x72xbf16>, vector<72x64xbf16>, vector<8x64xf32> -> vector<8x64xf32>
    %c0_25 = arith.constant 0 : index
    %c0_26 = arith.constant 0 : index
    %78 = vector.load %arg10[%c0_25, %c0_26] : memref<8x1xf32, #tpu.memory_space<vmem>>, vector<8x1xf32>
    %79 = vector.broadcast %78 : vector<8x1xf32> to vector<8x64xf32>
    %80 = arith.addf %77, %79 : vector<8x64xf32>
    %cst_27 = arith.constant 0.000000e+00 : f32
    %81 = vector.broadcast %cst_27 : f32 to vector<8x64xf32>
    %82 = arith.maximumf %80, %81 : vector<8x64xf32>
    %c0_28 = arith.constant 0 : index
    %c0_29 = arith.constant 0 : index
    %83 = vector.load %arg11[%c0_28, %c0_29] : memref<8x72xbf16, #tpu.memory_space<vmem>>, vector<8x72xbf16>
    %cst_30 = arith.constant 0.000000e+00 : bf16
    %84 = vector.broadcast %cst_30 : bf16 to vector<8x9xbf16>
    %85 = arith.truncf %82 : vector<8x64xf32> to vector<8x64xbf16>
    %86 = tpu.concatenate %84, %85, %84 in 1 : vector<8x9xbf16>, vector<8x64xbf16>, vector<8x9xbf16> -> vector<8x82xbf16>
    %87 = vector.extract_strided_slice %86 {offsets = [0, 0], sizes = [8, 64], strides = [1, 1]} : vector<8x82xbf16> to vector<8x64xbf16>
    %88 = vector.broadcast %1 : vector<1x64xbf16> to vector<8x64xbf16>
    %89 = arith.mulf %87, %88 : vector<8x64xbf16>
    %90 = vector.extract_strided_slice %86 {offsets = [0, 1], sizes = [8, 64], strides = [1, 1]} : vector<8x82xbf16> to vector<8x64xbf16>
    %91 = vector.extract_strided_slice %86 {offsets = [0, 2], sizes = [8, 64], strides = [1, 1]} : vector<8x82xbf16> to vector<8x64xbf16>
    %92 = vector.broadcast %2 : vector<1x64xbf16> to vector<8x64xbf16>
    %93 = arith.mulf %91, %92 : vector<8x64xbf16>
    %94 = vector.extract_strided_slice %86 {offsets = [0, 8], sizes = [8, 64], strides = [1, 1]} : vector<8x82xbf16> to vector<8x64xbf16>
    %95 = vector.broadcast %1 : vector<1x64xbf16> to vector<8x64xbf16>
    %96 = arith.mulf %94, %95 : vector<8x64xbf16>
    %97 = vector.extract_strided_slice %86 {offsets = [0, 9], sizes = [8, 64], strides = [1, 1]} : vector<8x82xbf16> to vector<8x64xbf16>
    %98 = vector.extract_strided_slice %86 {offsets = [0, 10], sizes = [8, 64], strides = [1, 1]} : vector<8x82xbf16> to vector<8x64xbf16>
    %99 = vector.broadcast %2 : vector<1x64xbf16> to vector<8x64xbf16>
    %100 = arith.mulf %98, %99 : vector<8x64xbf16>
    %101 = vector.extract_strided_slice %86 {offsets = [0, 16], sizes = [8, 64], strides = [1, 1]} : vector<8x82xbf16> to vector<8x64xbf16>
    %102 = vector.broadcast %1 : vector<1x64xbf16> to vector<8x64xbf16>
    %103 = arith.mulf %101, %102 : vector<8x64xbf16>
    %104 = vector.extract_strided_slice %86 {offsets = [0, 17], sizes = [8, 64], strides = [1, 1]} : vector<8x82xbf16> to vector<8x64xbf16>
    %105 = vector.extract_strided_slice %86 {offsets = [0, 18], sizes = [8, 64], strides = [1, 1]} : vector<8x82xbf16> to vector<8x64xbf16>
    %106 = vector.broadcast %2 : vector<1x64xbf16> to vector<8x64xbf16>
    %107 = arith.mulf %105, %106 : vector<8x64xbf16>
    %108 = tpu.concatenate %89, %90, %93, %96, %97, %100, %103, %104, %107 in 0 : vector<8x64xbf16>, vector<8x64xbf16>, vector<8x64xbf16>, vector<8x64xbf16>, vector<8x64xbf16>, vector<8x64xbf16>, vector<8x64xbf16>, vector<8x64xbf16>, vector<8x64xbf16> -> vector<72x64xbf16>
    %cst_31 = arith.constant dense<0.000000e+00> : vector<8x64xf32>
    %109 = tpu.matmul %83, %108, %cst_31 {dimension_numbers = #tpu.dot_dimension_numbers<[1], [0], [0], [1], [0, 0, 1, 1], [], []>} : vector<8x72xbf16>, vector<72x64xbf16>, vector<8x64xf32> -> vector<8x64xf32>
    %c0_32 = arith.constant 0 : index
    %c0_33 = arith.constant 0 : index
    %110 = vector.load %arg12[%c0_32, %c0_33] : memref<8x1xf32, #tpu.memory_space<vmem>>, vector<8x1xf32>
    %111 = vector.broadcast %110 : vector<8x1xf32> to vector<8x64xf32>
    %112 = arith.addf %109, %111 : vector<8x64xf32>
    %113 = arith.addf %112, %50 : vector<8x64xf32>
    %cst_34 = arith.constant 0.000000e+00 : f32
    %114 = vector.broadcast %cst_34 : f32 to vector<8x64xf32>
    %115 = arith.maximumf %113, %114 : vector<8x64xf32>
    %c0_35 = arith.constant 0 : index
    %c0_36 = arith.constant 0 : index
    %c0_37 = arith.constant 0 : index
    %116 = vector.load %arg13[%c0_35, %c0_36, %c0_37] : memref<1x8x64xf32, #tpu.memory_space<vmem>>, vector<1x8x64xf32>
    %117 = vector.shape_cast %116 : vector<1x8x64xf32> to vector<8x64xf32>
    %118 = vector.shape_cast %115 : vector<8x64xf32> to vector<1x8x64xf32>
    tpu.vector_store %arg13[%c0_35, %c0_36, %c0_37], %118 {strides = array<i32>} : memref<1x8x64xf32, #tpu.memory_space<vmem>>, vector<1x8x64xf32>,
    return
  }
  func.func @transform_0(%arg0: i32) -> (i32, i32, i32) {
    %c0_i32 = arith.constant 0 : i32
    %c0_i32_0 = arith.constant 0 : i32
    %c0_i32_1 = arith.constant 0 : i32
    return %arg0, %c0_i32, %c0_i32_0 : i32, i32, i32
  }
  func.func @transform_1(%arg0: i32) -> (i32, i32) {
    %c0_i32 = arith.constant 0 : i32
    %c0_i32_0 = arith.constant 0 : i32
    %c0_i32_1 = arith.constant 0 : i32
    return %c0_i32, %c0_i32_0 : i32, i32
  }
  func.func @transform_2(%arg0: i32) -> (i32, i32) {
    %c0_i32 = arith.constant 0 : i32
    %c0_i32_0 = arith.constant 0 : i32
    %c0_i32_1 = arith.constant 0 : i32
    return %c0_i32, %c0_i32_0 : i32, i32
  }
  func.func @transform_3(%arg0: i32) -> (i32, i32) {
    %c0_i32 = arith.constant 0 : i32
    %c0_i32_0 = arith.constant 0 : i32
    %c0_i32_1 = arith.constant 0 : i32
    return %c0_i32, %c0_i32_0 : i32, i32
  }
  func.func @transform_4(%arg0: i32) -> (i32, i32) {
    %c0_i32 = arith.constant 0 : i32
    %c0_i32_0 = arith.constant 0 : i32
    %c0_i32_1 = arith.constant 0 : i32
    return %c0_i32, %c0_i32_0 : i32, i32
  }
  func.func @transform_5(%arg0: i32) -> (i32, i32) {
    %c0_i32 = arith.constant 0 : i32
    %c0_i32_0 = arith.constant 0 : i32
    %c0_i32_1 = arith.constant 0 : i32
    return %c0_i32, %c0_i32_0 : i32, i32
  }
  func.func @transform_6(%arg0: i32) -> (i32, i32) {
    %c0_i32 = arith.constant 0 : i32
    %c0_i32_0 = arith.constant 0 : i32
    %c0_i32_1 = arith.constant 0 : i32
    return %c0_i32, %c0_i32_0 : i32, i32
  }
  func.func @transform_7(%arg0: i32) -> (i32, i32) {
    %c0_i32 = arith.constant 0 : i32
    %c0_i32_0 = arith.constant 0 : i32
    %c0_i32_1 = arith.constant 0 : i32
    return %c0_i32, %c0_i32_0 : i32, i32
  }
  func.func @transform_8(%arg0: i32) -> (i32, i32) {
    %c0_i32 = arith.constant 0 : i32
    %c0_i32_0 = arith.constant 0 : i32
    %c0_i32_1 = arith.constant 0 : i32
    return %c0_i32, %c0_i32_0 : i32, i32
  }
  func.func @transform_9(%arg0: i32) -> (i32, i32) {
    %c0_i32 = arith.constant 0 : i32
    %c0_i32_0 = arith.constant 0 : i32
    %c0_i32_1 = arith.constant 0 : i32
    return %c0_i32, %c0_i32_0 : i32, i32
  }
  func.func @transform_10(%arg0: i32) -> (i32, i32) {
    %c0_i32 = arith.constant 0 : i32
    %c0_i32_0 = arith.constant 0 : i32
    %c0_i32_1 = arith.constant 0 : i32
    return %c0_i32, %c0_i32_0 : i32, i32
  }
  func.func @transform_11(%arg0: i32) -> (i32, i32) {
    %c0_i32 = arith.constant 0 : i32
    %c0_i32_0 = arith.constant 0 : i32
    %c0_i32_1 = arith.constant 0 : i32
    return %c0_i32, %c0_i32_0 : i32, i32
  }
  func.func @transform_12(%arg0: i32) -> (i32, i32, i32) {
    %c0_i32 = arith.constant 0 : i32
    %c0_i32_0 = arith.constant 0 : i32
    %c0_i32_1 = arith.constant 0 : i32
    return %arg0, %c0_i32, %c0_i32_0 : i32, i32, i32
  }
}

</mosaic_0001>

<llo_original>
// kernel: down_res_block_forward.1
$region0: #{down_res_block_forward.1}
  #allocation0 [shape = 'u32[]', space=smem, size = 0x4, offset = 0x4, fixed_abs, tag = 'smem constant byte address 0x4 - core index']
  #allocation1 [shape = 'u32[72,128]{1,0:T(1,128)}', space=vmem, size = 0x9000, scoped, tag = 'internal scratch']
  %s0 = inlined_call_operand.vmem [shape: bf16[2,36,64], index: 0, kind: input, shape index: {}]
  %s1 = inlined_call_operand.vmem [shape: bf16[2,64], index: 1, kind: input, shape index: {}]
  %s2 = inlined_call_operand.vmem [shape: bf16[8,36], index: 2, kind: input, shape index: {}]
  %s3 = inlined_call_operand.vmem [shape: f32[8,1], index: 3, kind: input, shape index: {}]
  %s4 = inlined_call_operand.vmem [shape: bf16[8,4], index: 4, kind: input, shape index: {}]
  %s5 = inlined_call_operand.vmem [shape: f32[8,1], index: 5, kind: input, shape index: {}]
  %s6 = inlined_call_operand.vmem [shape: bf16[8,72], index: 6, kind: input, shape index: {}]
  %s7 = inlined_call_operand.vmem [shape: f32[8,1], index: 7, kind: input, shape index: {}]
  %s8 = inlined_call_operand.vmem [shape: bf16[8,72], index: 8, kind: input, shape index: {}]
  %s9 = inlined_call_operand.vmem [shape: f32[8,1], index: 9, kind: input, shape index: {}]
  %s10 = inlined_call_operand.vmem [shape: bf16[8,72], index: 10, kind: input, shape index: {}]
  %s11 = inlined_call_operand.vmem [shape: f32[8,1], index: 11, kind: input, shape index: {}]
  %s12 = inlined_call_operand.vmem [shape: f32[2,8,64], index: 12, kind: output, shape index: {}]
  %s13 = sld [smem:[#allocation0]]
  $region81: #{down_res_block_forward.1} parent=0
    _
  %s15 = ssub.s32 1, %s13
  %s16 = scalar_select 0, %s15, %s13
  loop: start=0, step=1, limit=4
  $region2: #{down_res_block_forward.1} parent=0 // loop_pre_header
    _
  $region3: #{down_res_block_forward.1} parent=0 // loop_header
    %s18 = sphi 0, %s22
    %p19 = scmp.ge.s32.totalorder %s18, 4
    %s28 = sphi 0, %s30
    %s31 = sphi 0, %s28
    %s32 = sphi 0, %s31
    %s48 = sphi 0, %s32
    %s52 = sphi 0, %s52
    %s54 = sphi 0, %s52
    %s55 = sphi 0, %s54
    %s69 = sphi 0, %s55
    %s73 = sphi 0, %s73
    %s75 = sphi 0, %s73
    %s76 = sphi 0, %s75
    %s90 = sphi 0, %s76
    %s94 = sphi 0, %s94
    %s96 = sphi 0, %s94
    %s97 = sphi 0, %s96
    %s111 = sphi 0, %s97
    %s115 = sphi 0, %s115
    %s117 = sphi 0, %s115
    %s118 = sphi 0, %s117
    %s132 = sphi 0, %s118
    %s136 = sphi 0, %s136
    %s138 = sphi 0, %s136
    %s139 = sphi 0, %s138
    %s153 = sphi 0, %s139
    %s157 = sphi 0, %s157
    %s159 = sphi 0, %s157
    %s160 = sphi 0, %s159
    %s174 = sphi 0, %s160
    %s178 = sphi 0, %s178
    %s180 = sphi 0, %s178
    %s181 = sphi 0, %s180
    %s195 = sphi 0, %s181
    %s199 = sphi 0, %s199
    %s201 = sphi 0, %s199
    %s202 = sphi 0, %s201
    %s216 = sphi 0, %s202
    %s220 = sphi 0, %s220
    %s222 = sphi 0, %s220
    %s223 = sphi 0, %s222
    %s237 = sphi 0, %s223
    %s241 = sphi 0, %s241
    %s243 = sphi 0, %s241
    %s244 = sphi 0, %s243
    %s258 = sphi 0, %s244
    %s262 = sphi 0, %s262
    %s264 = sphi 0, %s262
    %s265 = sphi 0, %s264
    %s279 = sphi 0, %s265
    %s285 = sphi 0, %s287
    %s288 = sphi 0, %s285
    %s289 = sphi 0, %s288
    %s305 = sphi 0, %s289
  $region4: #{down_res_block_forward.1} parent=0 // loop_header_branch
    %21 = sbr.rel (%p19) target = $region8
  $region5: #{down_res_block_forward.1} parent=0 // loop_body
    %s23 = ssub.s32 %s18, 1
    %s24 = ssub.s32 %s18, 2
    %s25 = sadd.s32 %s18, 1
    %s26 = ssub.s32 %s18, %s25
    %p27 = scmp.eq.s32.totalorder %s26, 0
    %s29 = sadd.s32 %s28, 1
    %s30 = scalar_select %p27, %s28, %s29
    %p33 = pneg %p27
    %p34 = scmp.eq.s32.totalorder %s18, 1
    %p35 = por %p33, %p34
    %p36 = scmp.ne.s32.totalorder %s28, %s31
    %p37 = scmp.eq.s32.totalorder %s18, 0
    %p38 = por %p36, %p37
    %p39 = scmp.ne.s32.totalorder %s28, %s31
    %p40 = scmp.eq.s32.totalorder %s23, 1
    %p41 = por %p39, %p40
    %p42 = scmp.ne.s32.totalorder %s31, %s32
    %p43 = scmp.eq.s32.totalorder %s23, 0
    %p44 = por %p42, %p43
    %p45 = scmp.ne.s32.totalorder %s31, %s32
    %p46 = scmp.eq.s32.totalorder %s24, 1
    %p47 = por %p45, %p46
    %p49 = scmp.ne.s32.totalorder %s32, %s48
    %p50 = scmp.eq.s32.totalorder %s24, 0
    %p51 = por %p49, %p50
    %s53 = sadd.s32 %s52, 1
    %p56 = scmp.eq.s32.totalorder %s18, 1
    %p57 = scmp.ne.s32.totalorder %s52, %s54
    %p58 = scmp.eq.s32.totalorder %s18, 0
    %p59 = por %p57, %p58
    %p60 = scmp.ne.s32.totalorder %s52, %s54
    %p61 = scmp.eq.s32.totalorder %s23, 1
    %p62 = por %p60, %p61
    %p63 = scmp.ne.s32.totalorder %s54, %s55
    %p64 = scmp.eq.s32.totalorder %s23, 0
    %p65 = por %p63, %p64
    %p66 = scmp.ne.s32.totalorder %s54, %s55
    %p67 = scmp.eq.s32.totalorder %s24, 1
    %p68 = por %p66, %p67
    %p70 = scmp.ne.s32.totalorder %s55, %s69
    %p71 = scmp.eq.s32.totalorder %s24, 0
    %p72 = por %p70, %p71
    %s74 = sadd.s32 %s73, 1
    %p77 = scmp.eq.s32.totalorder %s18, 1
    %p78 = scmp.ne.s32.totalorder %s73, %s75
    %p79 = scmp.eq.s32.totalorder %s18, 0
    %p80 = por %p78, %p79
    %p81 = scmp.ne.s32.totalorder %s73, %s75
    %p82 = scmp.eq.s32.totalorder %s23, 1
    %p83 = por %p81, %p82
    %p84 = scmp.ne.s32.totalorder %s75, %s76
    %p85 = scmp.eq.s32.totalorder %s23, 0
    %p86 = por %p84, %p85
    %p87 = scmp.ne.s32.totalorder %s75, %s76
    %p88 = scmp.eq.s32.totalorder %s24, 1
    %p89 = por %p87, %p88
    %p91 = scmp.ne.s32.totalorder %s76, %s90
    %p92 = scmp.eq.s32.totalorder %s24, 0
    %p93 = por %p91, %p92
    %s95 = sadd.s32 %s94, 1
    %p98 = scmp.eq.s32.totalorder %s18, 1
    %p99 = scmp.ne.s32.totalorder %s94, %s96
    %p100 = scmp.eq.s32.totalorder %s18, 0
    %p101 = por %p99, %p100
    %p102 = scmp.ne.s32.totalorder %s94, %s96
    %p103 = scmp.eq.s32.totalorder %s23, 1
    %p104 = por %p102, %p103
    %p105 = scmp.ne.s32.totalorder %s96, %s97
    %p106 = scmp.eq.s32.totalorder %s23, 0
    %p107 = por %p105, %p106
    %p108 = scmp.ne.s32.totalorder %s96, %s97
    %p109 = scmp.eq.s32.totalorder %s24, 1
    %p110 = por %p108, %p109
    %p112 = scmp.ne.s32.totalorder %s97, %s111
    %p113 = scmp.eq.s32.totalorder %s24, 0
    %p114 = por %p112, %p113
    %s116 = sadd.s32 %s115, 1
    %p119 = scmp.eq.s32.totalorder %s18, 1
    %p120 = scmp.ne.s32.totalorder %s115, %s117
    %p121 = scmp.eq.s32.totalorder %s18, 0
    %p122 = por %p120, %p121
    %p123 = scmp.ne.s32.totalorder %s115, %s117
    %p124 = scmp.eq.s32.totalorder %s23, 1
    %p125 = por %p123, %p124
    %p126 = scmp.ne.s32.totalorder %s117, %s118
    %p127 = scmp.eq.s32.totalorder %s23, 0
    %p128 = por %p126, %p127
    %p129 = scmp.ne.s32.totalorder %s117, %s118
    %p130 = scmp.eq.s32.totalorder %s24, 1
    %p131 = por %p129, %p130
    %p133 = scmp.ne.s32.totalorder %s118, %s132
    %p134 = scmp.eq.s32.totalorder %s24, 0
    %p135 = por %p133, %p134
    %s137 = sadd.s32 %s136, 1
    %p140 = scmp.eq.s32.totalorder %s18, 1
    %p141 = scmp.ne.s32.totalorder %s136, %s138
    %p142 = scmp.eq.s32.totalorder %s18, 0
    %p143 = por %p141, %p142
    %p144 = scmp.ne.s32.totalorder %s136, %s138
    %p145 = scmp.eq.s32.totalorder %s23, 1
    %p146 = por %p144, %p145
    %p147 = scmp.ne.s32.totalorder %s138, %s139
    %p148 = scmp.eq.s32.totalorder %s23, 0
    %p149 = por %p147, %p148
    %p150 = scmp.ne.s32.totalorder %s138, %s139
    %p151 = scmp.eq.s32.totalorder %s24, 1
    %p152 = por %p150, %p151
    %p154 = scmp.ne.s32.totalorder %s139, %s153
    %p155 = scmp.eq.s32.totalorder %s24, 0
    %p156 = por %p154, %p155
    %s158 = sadd.s32 %s157, 1
    %p161 = scmp.eq.s32.totalorder %s18, 1
    %p162 = scmp.ne.s32.totalorder %s157, %s159
    %p163 = scmp.eq.s32.totalorder %s18, 0
    %p164 = por %p162, %p163
    %p165 = scmp.ne.s32.totalorder %s157, %s159
    %p166 = scmp.eq.s32.totalorder %s23, 1
    %p167 = por %p165, %p166
    %p168 = scmp.ne.s32.totalorder %s159, %s160
    %p169 = scmp.eq.s32.totalorder %s23, 0
    %p170 = por %p168, %p169
    %p171 = scmp.ne.s32.totalorder %s159, %s160
    %p172 = scmp.eq.s32.totalorder %s24, 1
    %p173 = por %p171, %p172
    %p175 = scmp.ne.s32.totalorder %s160, %s174
    %p176 = scmp.eq.s32.totalorder %s24, 0
    %p177 = por %p175, %p176
    %s179 = sadd.s32 %s178, 1
    %p182 = scmp.eq.s32.totalorder %s18, 1
    %p183 = scmp.ne.s32.totalorder %s178, %s180
    %p184 = scmp.eq.s32.totalorder %s18, 0
    %p185 = por %p183, %p184
    %p186 = scmp.ne.s32.totalorder %s178, %s180
    %p187 = scmp.eq.s32.totalorder %s23, 1
    %p188 = por %p186, %p187
    %p189 = scmp.ne.s32.totalorder %s180, %s181
    %p190 = scmp.eq.s32.totalorder %s23, 0
    %p191 = por %p189, %p190
    %p192 = scmp.ne.s32.totalorder %s180, %s181
    %p193 = scmp.eq.s32.totalorder %s24, 1
    %p194 = por %p192, %p193
    %p196 = scmp.ne.s32.totalorder %s181, %s195
    %p197 = scmp.eq.s32.totalorder %s24, 0
    %p198 = por %p196, %p197
    %s200 = sadd.s32 %s199, 1
    %p203 = scmp.eq.s32.totalorder %s18, 1
    %p204 = scmp.ne.s32.totalorder %s199, %s201
    %p205 = scmp.eq.s32.totalorder %s18, 0
    %p206 = por %p204, %p205
    %p207 = scmp.ne.s32.totalorder %s199, %s201
    %p208 = scmp.eq.s32.totalorder %s23, 1
    %p209 = por %p207, %p208
    %p210 = scmp.ne.s32.totalorder %s201, %s202
    %p211 = scmp.eq.s32.totalorder %s23, 0
    %p212 = por %p210, %p211
    %p213 = scmp.ne.s32.totalorder %s201, %s202
    %p214 = scmp.eq.s32.totalorder %s24, 1
    %p215 = por %p213, %p214
    %p217 = scmp.ne.s32.totalorder %s202, %s216
    %p218 = scmp.eq.s32.totalorder %s24, 0
    %p219 = por %p217, %p218
    %s221 = sadd.s32 %s220, 1
    %p224 = scmp.eq.s32.totalorder %s18, 1
    %p225 = scmp.ne.s32.totalorder %s220, %s222
    %p226 = scmp.eq.s32.totalorder %s18, 0
    %p227 = por %p225, %p226
    %p228 = scmp.ne.s32.totalorder %s220, %s222
    %p229 = scmp.eq.s32.totalorder %s23, 1
    %p230 = por %p228, %p229
    %p231 = scmp.ne.s32.totalorder %s222, %s223
    %p232 = scmp.eq.s32.totalorder %s23, 0
    %p233 = por %p231, %p232
    %p234 = scmp.ne.s32.totalorder %s222, %s223
    %p235 = scmp.eq.s32.totalorder %s24, 1
    %p236 = por %p234, %p235
    %p238 = scmp.ne.s32.totalorder %s223, %s237
    %p239 = scmp.eq.s32.totalorder %s24, 0
    %p240 = por %p238, %p239
    %s242 = sadd.s32 %s241, 1
    %p245 = scmp.eq.s32.totalorder %s18, 1
    %p246 = scmp.ne.s32.totalorder %s241, %s243
    %p247 = scmp.eq.s32.totalorder %s18, 0
    %p248 = por %p246, %p247
    %p249 = scmp.ne.s32.totalorder %s241, %s243
    %p250 = scmp.eq.s32.totalorder %s23, 1
    %p251 = por %p249, %p250
    %p252 = scmp.ne.s32.totalorder %s243, %s244
    %p253 = scmp.eq.s32.totalorder %s23, 0
    %p254 = por %p252, %p253
    %p255 = scmp.ne.s32.totalorder %s243, %s244
    %p256 = scmp.eq.s32.totalorder %s24, 1
    %p257 = por %p255, %p256
    %p259 = scmp.ne.s32.totalorder %s244, %s258
    %p260 = scmp.eq.s32.totalorder %s24, 0
    %p261 = por %p259, %p260
    %s263 = sadd.s32 %s262, 1
    %p266 = scmp.eq.s32.totalorder %s18, 1
    %p267 = scmp.ne.s32.totalorder %s262, %s264
    %p268 = scmp.eq.s32.totalorder %s18, 0
    %p269 = por %p267, %p268
    %p270 = scmp.ne.s32.totalorder %s262, %s264
    %p271 = scmp.eq.s32.totalorder %s23, 1
    %p272 = por %p270, %p271
    %p273 = scmp.ne.s32.totalorder %s264, %s265
    %p274 = scmp.eq.s32.totalorder %s23, 0
    %p275 = por %p273, %p274
    %p276 = scmp.ne.s32.totalorder %s264, %s265
    %p277 = scmp.eq.s32.totalorder %s24, 1
    %p278 = por %p276, %p277
    %p280 = scmp.ne.s32.totalorder %s265, %s279
    %p281 = scmp.eq.s32.totalorder %s24, 0
    %p282 = por %p280, %p281
    %s283 = ssub.s32 %s18, %s25
    %p284 = scmp.eq.s32.totalorder %s283, 0
    %s286 = sadd.s32 %s285, 1
    %s287 = scalar_select %p284, %s285, %s286
    %p290 = pneg %p284
    %p291 = scmp.eq.s32.totalorder %s18, 1
    %p292 = por %p290, %p291
    %p293 = scmp.ne.s32.totalorder %s285, %s288
    %p294 = scmp.eq.s32.totalorder %s18, 0
    %p295 = por %p293, %p294
    %p296 = scmp.ne.s32.totalorder %s285, %s288
    %p297 = scmp.eq.s32.totalorder %s23, 1
    %p298 = por %p296, %p297
    %p299 = scmp.ne.s32.totalorder %s288, %s289
    %p300 = scmp.eq.s32.totalorder %s23, 0
    %p301 = por %p299, %p300
    %p302 = scmp.ne.s32.totalorder %s288, %s289
    %p303 = scmp.eq.s32.totalorder %s24, 1
    %p304 = por %p302, %p303
    %p306 = scmp.ne.s32.totalorder %s289, %s305
    %p307 = scmp.eq.s32.totalorder %s24, 0
    %p308 = por %p306, %p307
    %p309 = scmp.le.s32.totalorder 1, %s18
    %p310 = scmp.lt.s32.totalorder %s18, 3
    %p311 = pnand %p309, %p310
    %p312 = pneg %p311
    // Predicated region
    $region9: #{down_res_block_forward.1} parent=5 // pred_check
      _
    $region10: #{down_res_block_forward.1} parent=5 // pred_check_branch
      %314 = sbr.rel (%p311) target = $region12
    $region11: #{down_res_block_forward.1} parent=5 // pred_region
      %s315 = ssub.s32 %s18, 1
      // Predicated region
      $region13: #{down_res_block_forward.1} parent=11 // pred_check
        %p316 = pneg %p65
      $region14: #{down_res_block_forward.1} parent=11 // pred_check_branch
        %318 = sbr.rel (%p316) target = $region16
      $region15: #{down_res_block_forward.1} parent=11 // pred_region
        _
      $region16: #{down_res_block_forward.1} parent=11 // pred_fallthru
        _
      // Predicated region
      $region17: #{down_res_block_forward.1} parent=11 // pred_check
        %p319 = pneg %p86
      $region18: #{down_res_block_forward.1} parent=11 // pred_check_branch
        %321 = sbr.rel (%p319) target = $region20
      $region19: #{down_res_block_forward.1} parent=11 // pred_region
        _
      $region20: #{down_res_block_forward.1} parent=11 // pred_fallthru
        _
      // Predicated region
      $region21: #{down_res_block_forward.1} parent=11 // pred_check
        %p322 = pneg %p107
      $region22: #{down_res_block_forward.1} parent=11 // pred_check_branch
        %324 = sbr.rel (%p322) target = $region24
      $region23: #{down_res_block_forward.1} parent=11 // pred_region
        _
      $region24: #{down_res_block_forward.1} parent=11 // pred_fallthru
        _
      // Predicated region
      $region25: #{down_res_block_forward.1} parent=11 // pred_check
        %p325 = pneg %p128
      $region26: #{down_res_block_forward.1} parent=11 // pred_check_branch
        %327 = sbr.rel (%p325) target = $region28
      $region27: #{down_res_block_forward.1} parent=11 // pred_region
        _
      $region28: #{down_res_block_forward.1} parent=11 // pred_fallthru
        _
      // Predicated region
      $region29: #{down_res_block_forward.1} parent=11 // pred_check
        %p328 = pneg %p149
      $region30: #{down_res_block_forward.1} parent=11 // pred_check_branch
        %330 = sbr.rel (%p328) target = $region32
      $region31: #{down_res_block_forward.1} parent=11 // pred_region
        _
      $region32: #{down_res_block_forward.1} parent=11 // pred_fallthru
        _
      // Predicated region
      $region33: #{down_res_block_forward.1} parent=11 // pred_check
        %p331 = pneg %p170
      $region34: #{down_res_block_forward.1} parent=11 // pred_check_branch
        %333 = sbr.rel (%p331) target = $region36
      $region35: #{down_res_block_forward.1} parent=11 // pred_region
        _
      $region36: #{down_res_block_forward.1} parent=11 // pred_fallthru
        _
      // Predicated region
      $region37: #{down_res_block_forward.1} parent=11 // pred_check
        %p334 = pneg %p191
      $region38: #{down_res_block_forward.1} parent=11 // pred_check_branch
        %336 = sbr.rel (%p334) target = $region40
      $region39: #{down_res_block_forward.1} parent=11 // pred_region
        _
      $region40: #{down_res_block_forward.1} parent=11 // pred_fallthru
        _
      // Predicated region
      $region41: #{down_res_block_forward.1} parent=11 // pred_check
        %p337 = pneg %p212
      $region42: #{down_res_block_forward.1} parent=11 // pred_check_branch
        %339 = sbr.rel (%p337) target = $region44
      $region43: #{down_res_block_forward.1} parent=11 // pred_region
        _
      $region44: #{down_res_block_forward.1} parent=11 // pred_fallthru
        _
      // Predicated region
      $region45: #{down_res_block_forward.1} parent=11 // pred_check
        %p340 = pneg %p233
      $region46: #{down_res_block_forward.1} parent=11 // pred_check_branch
        %342 = sbr.rel (%p340) target = $region48
      $region47: #{down_res_block_forward.1} parent=11 // pred_region
        _
      $region48: #{down_res_block_forward.1} parent=11 // pred_fallthru
        _
      // Predicated region
      $region49: #{down_res_block_forward.1} parent=11 // pred_check
        %p343 = pneg %p254
      $region50: #{down_res_block_forward.1} parent=11 // pred_check_branch
        %345 = sbr.rel (%p343) target = $region52
      $region51: #{down_res_block_forward.1} parent=11 // pred_region
        _
      $region52: #{down_res_block_forward.1} parent=11 // pred_fallthru
        _
      // Predicated region
      $region53: #{down_res_block_forward.1} parent=11 // pred_check
        %p346 = pneg %p275
      $region54: #{down_res_block_forward.1} parent=11 // pred_check_branch
        %348 = sbr.rel (%p346) target = $region56
      $region55: #{down_res_block_forward.1} parent=11 // pred_region
        _
      $region56: #{down_res_block_forward.1} parent=11 // pred_fallthru
        _
    $region12: #{down_res_block_forward.1} parent=5 // pred_fallthru
      _
    %p349 = scmp.lt.s32.totalorder %s18, 2
    // Predicated region
    $region57: #{down_res_block_forward.1} parent=5 // pred_check
      %p350 = pneg %p349
    $region58: #{down_res_block_forward.1} parent=5 // pred_check_branch
      %352 = sbr.rel (%p350) target = $region60
    $region59: #{down_res_block_forward.1} parent=5 // pred_region
      // Predicated region
      $region61: #{down_res_block_forward.1} parent=59 // pred_check
        %p353 = pneg %p38
      $region62: #{down_res_block_forward.1} parent=59 // pred_check_branch
        %355 = sbr.rel (%p353) target = $region64
      $region63: #{down_res_block_forward.1} parent=59 // pred_region
        %p356 = scmp.lt.s32.totalorder %s18, 1
        %s357 = scalar_select %p356, %s18, 1
        %s358 = smul.addr %s357, 5
        %s359 = smul.addr %s358, 4
        %s360 = scalar_lea.vmem %s0, %s359
      $region64: #{down_res_block_forward.1} parent=59 // pred_fallthru
        _
    $region60: #{down_res_block_forward.1} parent=5 // pred_fallthru
      _
    %p361 = scmp.le.s32.totalorder 1, %s18
    %p362 = scmp.lt.s32.totalorder %s18, 3
    %p363 = pnand %p361, %p362
    %p364 = pneg %p363
    // Predicated region
    $region65: #{down_res_block_forward.1} parent=5 // pred_check
      _
    $region66: #{down_res_block_forward.1} parent=5 // pred_check_branch
      %366 = sbr.rel (%p363) target = $region68
    $region67: #{down_res_block_forward.1} parent=5 // pred_region
      %s367 = ssub.s32 %s18, 1
      %p368 = scmp.lt.s32.totalorder %s23, 1
      %s369 = scalar_select %p368, %s23, 1
      %s370 = smul.addr %s369, 5
      %s371 = smul.addr %s370, 4
      %s372 = scalar_lea.vmem %s0, %s371
      %p373 = pneg %p44
      %p374 = pneg %p41
      %p375 = pneg %p65
      %p376 = pneg %p62
      %p377 = pneg %p86
      %p378 = pneg %p83
      %p379 = pneg %p107
      %p380 = pneg %p104
      %p381 = pneg %p128
      %p382 = pneg %p125
      %p383 = pneg %p149
      %p384 = pneg %p146
      %p385 = pneg %p170
      %p386 = pneg %p167
      %p387 = pneg %p191
      %p388 = pneg %p188
      %p389 = pneg %p212
      %p390 = pneg %p209
      %p391 = pneg %p233
      %p392 = pneg %p230
      %p393 = pneg %p254
      %p394 = pneg %p251
      %p395 = pneg %p275
      %p396 = pneg %p272
      %p397 = pneg %p301
      %p398 = pneg %p298
      %p399 = scmp.lt.s32.totalorder %s23, 1
      %s400 = scalar_select %p399, %s23, 1
      %s401 = smul.addr %s400, 8
      %s402 = scalar_lea.vmem %s12, %s401
      %p403 = scmp.lt.s32.totalorder %s23, 1
      %s404 = scalar_select %p403, %s23, 1
      %s405 = smul.addr %s404, 5
      %s406 = smul.addr %s405, 4
      %s407 = scalar_lea.vmem %s0, %s406
      %p408 = scmp.lt.s32.totalorder %s23, 1
      %s409 = scalar_select %p408, %s23, 1
      %s410 = smul.addr %s409, 8
      %s411 = scalar_lea.vmem %s12, %s410
      %v413 = vld [vmem:[%s1] sm:$0x1]
      %v414 = vld [vmem:[%s407] sm:$0xf]
      %v415 = vld [vmem:[%s407 + $0x4] sm:$0xf]
      %v416 = vld [vmem:[%s407 + $0x8] sm:$0xf]
      %v417 = vld [vmem:[%s407 + $0xc] sm:$0xf]
      %v418 = vld [vmem:[%s407 + $0x10] sm:$0x3]
      %v419 = vld [vmem:[%s2] sm:$0xf]
      %v420 = vld [vmem:[%s3] sm:$0xff]
      %422 = vset.pattern.permute.xlu0 0
      %423 = vperm.xlu0 %422, %v420
      %v424 = vpop.permute.xlu0 %423
      %v431 = vunpack.c.l.b16 %v414
      %v432 = vunpack.c.l.b16 %v415
      %v433 = vunpack.c.l.b16 %v416
      %v434 = vunpack.c.l.b16 %v417
      %v435 = vunpack.c.l.b16 %v418
      %v436 = vpack.c.b16 %v432, %v431
      %v437 = vpack.c.b16 %v434, %v433
      %v438 = vpack.c.b16 %v435, %v435
      %vm441 = vcmask 293888
      %v443 = vsel %vm441, %v419, 0
      %vm445 = vcmask 1041408
      %v447 = vsel %vm445, %v438, 0
      %449 = vmatpush.bf16.msra.mxu0 0
      %450 = vmatpush.bf16.msra.mxu0 0
      %451 = vmatpush.bf16.msra.mxu0 0
      %452 = vmatpush.bf16.msra.mxu0 0
      %453 = vmatpush.bf16.msra.mxu0 0
      %454 = vmatpush.bf16.msra.mxu0 %v447
      %455 = vmatpush.bf16.msra.mxu0 %v437
      %456 = vmatpush.bf16.msra.mxu0 %v436
      %457 = vmatmul.bf16.gmra.mxu0 %v443
      %v458 = vpop.f32.mrf.mxu0
      %v459 = vadd.f32 %v424, %v458
      %v460 = vpop.f32.mrf.mxu0
      %461 = vdwg.mxu0
      %v462 = vmax.f32 %v459, 0.0
      %v463 = vld [vmem:[%s4] sm:$0xf]
      %v464 = vld [vmem:[%s5] sm:$0xff]
      %466 = vset.pattern.permute.xlu0 0
      %467 = vperm.xlu0 %466, %v464
      %v468 = vpop.permute.xlu0 %467
      %vm470 = vcmask 31744
      %v472 = vsel %vm470, %v463, 0
      %v475 = vsel %vm445, %v416, 0
      %477 = vmatpush.bf16.msra.mxu0 0
      %478 = vmatpush.bf16.msra.mxu0 0
      %479 = vmatpush.bf16.msra.mxu0 0
      %480 = vmatpush.bf16.msra.mxu0 0
      %481 = vmatpush.bf16.msra.mxu0 0
      %482 = vmatpush.bf16.msra.mxu0 0
      %483 = vmatpush.bf16.msra.mxu0 0
      %484 = vmatpush.bf16.msra.mxu0 %v475
      %485 = vmatmul.bf16.gmra.mxu0 %v472
      %v486 = vpop.f32.mrf.mxu0
      %v487 = vadd.f32 %v468, %v486
      %v488 = vpop.f32.mrf.mxu0
      %489 = vdwg.mxu0
      %v490 = vld [vmem:[%s6] sm:$0xf]
      %v491 = vpack.c.bf16 %v462, %v462
      %v493 = vunpack.c.l.b16 %v491
      %v494 = vpack.c.b16 %v493, %v493
      %495 = vrot.lane.b32.xlu0 %v494, 9
      %v496 = vpop.permute.xlu0 %495
      %vm497 = vcmask 72704
      %v500 = vsel %vm497, 0, %v496
      %vm501 = vcmask 596992
      %v502 = vsel %vm501, %v500, 0
      %v505 = vpack.i.b16 %v413, %v413
      %v507 = vperm.slane %v505, 0
      %v508 = vunpack.c.l.bf16 %v502
      %v509 = vunpack.c.l.bf16 %v507
      %v510 = vmul.f32 %v508, %v509
      %v511 = vpack.c.bf16 %v510, %v510
      %v512 = vshrl.u32 %v413, 16
      %v513 = vpack.i.b16 %v512, %v512
      %v515 = vperm.slane %v513, 0
      %v516 = vunpack.c.l.bf16 %v515
      %518 = vrot.lane.b32.xlu0 %v516, 2
      %v519 = vpop.permute.xlu0 %518
      %v521 = vmul.f32 %v508, %v519
      %v522 = vpack.c.bf16 %v521, %v521
      %524 = vrot.lane.b32.xlu0 %v509, 8
      %v525 = vpop.permute.xlu0 %524
      %v527 = vmul.f32 %v508, %v525
      %v528 = vpack.c.bf16 %v527, %v527
      %529 = vrot.lane.b32.xlu0 %v516, 10
      %v530 = vpop.permute.xlu0 %529
      %v532 = vmul.f32 %v508, %v530
      %v533 = vpack.c.bf16 %v532, %v532
      %534 = vrot.lane.b32.xlu0 %v509, 16
      %v535 = vpop.permute.xlu0 %534
      %v537 = vmul.f32 %v508, %v535
      %v538 = vpack.c.bf16 %v537, %v537
      %539 = vrot.lane.b32.xlu0 %v516, 18
      %v540 = vpop.permute.xlu0 %539
      %v542 = vmul.f32 %v508, %v540
      %v543 = vpack.c.bf16 %v542, %v542
      %v545 = vrot.slane %v502, 4
      %546 = vrot.lane.b32.xlu0 %v545, 127
      %v547 = vpop.permute.xlu0 %546
      %v549 = vunpack.c.l.b16 %v522
      %v550 = vpack.c.b16 %v549, %v549
      %551 = vrot.lane.b32.xlu0 %v550, 126
      %v552 = vpop.permute.xlu0 %551
      %v554 = vunpack.c.l.b16 %v528
      %v555 = vpack.c.b16 %v554, %v554
      %556 = vrot.lane.b32.xlu0 %v555, 120
      %v557 = vpop.permute.xlu0 %556
      %558 = vrot.lane.b32.xlu0 %v502, 119
      %v559 = vpop.permute.xlu0 %558
      %v561 = vunpack.c.l.b16 %v533
      %v562 = vpack.c.b16 %v561, %v561
      %563 = vrot.lane.b32.xlu0 %v562, 118
      %v564 = vpop.permute.xlu0 %563
      %v566 = vunpack.c.l.b16 %v538
      %v567 = vpack.c.b16 %v566, %v566
      %568 = vrot.lane.b32.xlu0 %v567, 112
      %v569 = vpop.permute.xlu0 %568
      %570 = vrot.lane.b32.xlu0 %v545, 111
      %v571 = vpop.permute.xlu0 %570
      %v573 = vunpack.c.l.b16 %v543
      %v574 = vpack.c.b16 %v573, %v573
      %575 = vrot.lane.b32.xlu0 %v574, 110
      %v576 = vpop.permute.xlu0 %575
      %vm577 = vcmask 1043456
      %v580 = vsel %vm577, %v511, %v547
      %v584 = vsel %vm577, %v552, %v557
      %v588 = vsel %vm577, %v559, %v564
      %v592 = vsel %vm577, %v569, %v571
      %v594 = vld [vmem:[%s7] sm:$0xff]
      %596 = vset.pattern.permute.xlu0 0
      %597 = vperm.xlu0 %596, %v594
      %v598 = vpop.permute.xlu0 %597
      %vm600 = vcmask 588800
      %v602 = vsel %vm600, %v490, 0
      %v605 = vsel %vm577, %v576, 0
      %607 = vmatpush.bf16.msra.mxu0 0
      %608 = vmatpush.bf16.msra.mxu0 0
      %609 = vmatpush.bf16.msra.mxu0 0
      %610 = vmatpush.bf16.msra.mxu0 %v605
      %611 = vmatpush.bf16.msra.mxu0 %v592
      %612 = vmatpush.bf16.msra.mxu0 %v588
      %613 = vmatpush.bf16.msra.mxu0 %v584
      %614 = vmatpush.bf16.msra.mxu0 %v580
      %615 = vmatmul.bf16.gmra.mxu0 %v602
      %v616 = vpop.f32.mrf.mxu0
      %v617 = vadd.f32 %v598, %v616
      %v618 = vpop.f32.mrf.mxu0
      %619 = vdwg.mxu0
      %v620 = vadd.f32 %v617, %v487
      %v621 = vmax.f32 %v620, 0.0
      %v622 = vld [vmem:[%s8] sm:$0xf]
      %v623 = vpack.c.bf16 %v621, %v621
      %v625 = vunpack.c.l.b16 %v623
      %v626 = vpack.c.b16 %v625, %v625
      %627 = vrot.lane.b32.xlu0 %v626, 9
      %v628 = vpop.permute.xlu0 %627
      %v630 = vsel %vm497, 0, %v628
      %v631 = vsel %vm501, %v630, 0
      %v633 = vunpack.c.l.bf16 %v631
      %v634 = vmul.f32 %v633, %v509
      %v635 = vpack.c.bf16 %v634, %v634
      %v636 = vmul.f32 %v633, %v519
      %v637 = vpack.c.bf16 %v636, %v636
      %v638 = vmul.f32 %v633, %v525
      %v639 = vpack.c.bf16 %v638, %v638
      %v640 = vmul.f32 %v633, %v530
      %v641 = vpack.c.bf16 %v640, %v640
      %v642 = vmul.f32 %v633, %v535
      %v643 = vpack.c.bf16 %v642, %v642
      %v644 = vmul.f32 %v633, %v540
      %v645 = vpack.c.bf16 %v644, %v644
      %v647 = vrot.slane %v631, 4
      %648 = vrot.lane.b32.xlu0 %v647, 127
      %v649 = vpop.permute.xlu0 %648
      %v651 = vunpack.c.l.b16 %v637
      %v652 = vpack.c.b16 %v651, %v651
      %653 = vrot.lane.b32.xlu0 %v652, 126
      %v654 = vpop.permute.xlu0 %653
      %v656 = vunpack.c.l.b16 %v639
      %v657 = vpack.c.b16 %v656, %v656
      %658 = vrot.lane.b32.xlu0 %v657, 120
      %v659 = vpop.permute.xlu0 %658
      %660 = vrot.lane.b32.xlu0 %v631, 119
      %v661 = vpop.permute.xlu0 %660
      %v663 = vunpack.c.l.b16 %v641
      %v664 = vpack.c.b16 %v663, %v663
      %665 = vrot.lane.b32.xlu0 %v664, 118
      %v666 = vpop.permute.xlu0 %665
      %v668 = vunpack.c.l.b16 %v643
      %v669 = vpack.c.b16 %v668, %v668
      %670 = vrot.lane.b32.xlu0 %v669, 112
      %v671 = vpop.permute.xlu0 %670
      %672 = vrot.lane.b32.xlu0 %v647, 111
      %v673 = vpop.permute.xlu0 %672
      %v675 = vunpack.c.l.b16 %v645
      %v676 = vpack.c.b16 %v675, %v675
      %677 = vrot.lane.b32.xlu0 %v676, 110
      %v678 = vpop.permute.xlu0 %677
      %v681 = vsel %vm577, %v635, %v649
      %v685 = vsel %vm577, %v654, %v659
      %v689 = vsel %vm577, %v661, %v666
      %v693 = vsel %vm577, %v671, %v673
      %v695 = vld [vmem:[%s9] sm:$0xff]
      %697 = vset.pattern.permute.xlu0 0
      %698 = vperm.xlu0 %697, %v695
      %v699 = vpop.permute.xlu0 %698
      %v702 = vsel %vm600, %v622, 0
      %v705 = vsel %vm577, %v678, 0
      %707 = vmatpush.bf16.msra.mxu0 0
      %708 = vmatpush.bf16.msra.mxu0 0
      %709 = vmatpush.bf16.msra.mxu0 0
      %710 = vmatpush.bf16.msra.mxu0 %v705
      %711 = vmatpush.bf16.msra.mxu0 %v693
      %712 = vmatpush.bf16.msra.mxu0 %v689
      %713 = vmatpush.bf16.msra.mxu0 %v685
      %714 = vmatpush.bf16.msra.mxu0 %v681
      %715 = vmatmul.bf16.gmra.mxu0 %v702
      %v716 = vpop.f32.mrf.mxu0
      %v717 = vadd.f32 %v699, %v716
      %v718 = vpop.f32.mrf.mxu0
      %719 = vdwg.mxu0
      %v720 = vmax.f32 %v717, 0.0
      %v721 = vld [vmem:[%s10] sm:$0xf]
      %v722 = vpack.c.bf16 %v720, %v720
      %v724 = vunpack.c.l.b16 %v722
      %v725 = vpack.c.b16 %v724, %v724
      %726 = vrot.lane.b32.xlu0 %v725, 9
      %v727 = vpop.permute.xlu0 %726
      %v729 = vsel %vm497, 0, %v727
      %v730 = vsel %vm501, %v729, 0
      %v732 = vunpack.c.l.bf16 %v730
      %v733 = vmul.f32 %v732, %v509
      %v734 = vpack.c.bf16 %v733, %v733
      %v735 = vmul.f32 %v732, %v519
      %v736 = vpack.c.bf16 %v735, %v735
      %v737 = vmul.f32 %v732, %v525
      %v738 = vpack.c.bf16 %v737, %v737
      %v739 = vmul.f32 %v732, %v530
      %v740 = vpack.c.bf16 %v739, %v739
      %v741 = vmul.f32 %v732, %v535
      %v742 = vpack.c.bf16 %v741, %v741
      %v743 = vmul.f32 %v732, %v540
      %v744 = vpack.c.bf16 %v743, %v743
      %v746 = vrot.slane %v730, 4
      %747 = vrot.lane.b32.xlu0 %v746, 127
      %v748 = vpop.permute.xlu0 %747
      %v750 = vunpack.c.l.b16 %v736
      %v751 = vpack.c.b16 %v750, %v750
      %752 = vrot.lane.b32.xlu0 %v751, 126
      %v753 = vpop.permute.xlu0 %752
      %v755 = vunpack.c.l.b16 %v738
      %v756 = vpack.c.b16 %v755, %v755
      %757 = vrot.lane.b32.xlu0 %v756, 120
      %v758 = vpop.permute.xlu0 %757
      %759 = vrot.lane.b32.xlu0 %v730, 119
      %v760 = vpop.permute.xlu0 %759
      %v762 = vunpack.c.l.b16 %v740
      %v763 = vpack.c.b16 %v762, %v762
      %764 = vrot.lane.b32.xlu0 %v763, 118
      %v765 = vpop.permute.xlu0 %764
      %v767 = vunpack.c.l.b16 %v742
      %v768 = vpack.c.b16 %v767, %v767
      %769 = vrot.lane.b32.xlu0 %v768, 112
      %v770 = vpop.permute.xlu0 %769
      %771 = vrot.lane.b32.xlu0 %v746, 111
      %v772 = vpop.permute.xlu0 %771
      %v774 = vunpack.c.l.b16 %v744
      %v775 = vpack.c.b16 %v774, %v774
      %776 = vrot.lane.b32.xlu0 %v775, 110
      %v777 = vpop.permute.xlu0 %776
      %v780 = vsel %vm577, %v734, %v748
      %v784 = vsel %vm577, %v753, %v758
      %v788 = vsel %vm577, %v760, %v765
      %v792 = vsel %vm577, %v770, %v772
      %v794 = vld [vmem:[%s11] sm:$0xff]
      %796 = vset.pattern.permute.xlu0 0
      %797 = vperm.xlu0 %796, %v794
      %v798 = vpop.permute.xlu0 %797
      %v801 = vsel %vm600, %v721, 0
      %v804 = vsel %vm577, %v777, 0
      %806 = vmatpush.bf16.msra.mxu0 0
      %807 = vmatpush.bf16.msra.mxu0 0
      %808 = vmatpush.bf16.msra.mxu0 0
      %809 = vmatpush.bf16.msra.mxu0 %v804
      %810 = vmatpush.bf16.msra.mxu0 %v792
      %811 = vmatpush.bf16.msra.mxu0 %v788
      %812 = vmatpush.bf16.msra.mxu0 %v784
      %813 = vmatpush.bf16.msra.mxu0 %v780
      %814 = vmatmul.bf16.gmra.mxu0 %v801
      %v815 = vpop.f32.mrf.mxu0
      %v816 = vadd.f32 %v798, %v815
      %v817 = vpop.f32.mrf.mxu0
      %818 = vdwg.mxu0
      %v819 = vadd.f32 %v816, %v621
      %v820 = vmax.f32 %v819, 0.0
      %vm821 = vcmask 523264
      %822 = vst.msk [vmem:[%s411] sm:$0xff] %vm821, %v820
      %p823 = scmp.lt.s32.totalorder %s23, 1
      %s824 = scalar_select %p823, %s23, 1
      %s825 = smul.addr %s824, 8
      %s826 = scalar_lea.vmem %s12, %s825
      // Predicated region
      $region69: #{down_res_block_forward.1} parent=67 // pred_check
        %p827 = pneg %p298
      $region70: #{down_res_block_forward.1} parent=67 // pred_check_branch
        %829 = sbr.rel (%p827) target = $region72
      $region71: #{down_res_block_forward.1} parent=67 // pred_region
        _
      $region72: #{down_res_block_forward.1} parent=67 // pred_fallthru
        _
    $region68: #{down_res_block_forward.1} parent=5 // pred_fallthru
      _
    %p830 = scmp.le.s32.totalorder 2, %s18
    // Predicated region
    $region73: #{down_res_block_forward.1} parent=5 // pred_check
      %p831 = pneg %p830
    $region74: #{down_res_block_forward.1} parent=5 // pred_check_branch
      %833 = sbr.rel (%p831) target = $region76
    $region75: #{down_res_block_forward.1} parent=5 // pred_region
      %s834 = ssub.s32 %s18, 2
      // Predicated region
      $region77: #{down_res_block_forward.1} parent=75 // pred_check
        %p835 = pneg %p304
      $region78: #{down_res_block_forward.1} parent=75 // pred_check_branch
        %837 = sbr.rel (%p835) target = $region80
      $region79: #{down_res_block_forward.1} parent=75 // pred_region
        %p838 = scmp.lt.s32.totalorder %s24, 1
        %s839 = scalar_select %p838, %s24, 1
        %s840 = smul.addr %s839, 8
        %s841 = scalar_lea.vmem %s12, %s840
      $region80: #{down_res_block_forward.1} parent=75 // pred_fallthru
        _
    $region76: #{down_res_block_forward.1} parent=5 // pred_fallthru
      _
  $region6: #{down_res_block_forward.1} parent=0 // loop_footer
    %s22 = sadd.s32 1, %s18
  $region7: #{down_res_block_forward.1} parent=0 // loop_footer_branch
    %17 = sbr.rel target = $region3
  $region8: #{down_res_block_forward.1} parent=0 // loop_exit
    _

</llo_original>
